<compile_context>
chip_gen: v5e
topology: v5e:2x2
jax: 0.10.0
libtpu: 0.0.40
codegen_flags: <defaults>
</compile_context>

<pallas_src>
import functools

import jax
import jax.numpy as jnp
from jax.experimental import pallas as pl
from jax.experimental.pallas import tpu as pltpu


def _bart_attn_kernel(x_ref, wqkv_ref, bqkv_ref, wo_ref, bo_ref, out_ref,
                      ctx_ref, *, num_heads: int):
    """One grid step = `Bb` batch elements; everything resident in VMEM."""
    Bb, T, E = x_ref.shape
    D = E // num_heads

    # ---- fused Q/K/V projection: one MXU pass with N = 3E ----
    x = x_ref[...].reshape(Bb * T, E)
    qkv = jnp.dot(x, wqkv_ref[...], preferred_element_type=jnp.float32)
    qkv = qkv + bqkv_ref[...]                         # (Bb*T, 3E)

    # scaling is already folded into Wq/bq (param prep), so q is ready to use
    q = qkv[:, 0:E].reshape(Bb, T, E)
    k = qkv[:, E:2 * E].reshape(Bb, T, E)
    v = qkv[:, 2 * E:3 * E].reshape(Bb, T, E)

    # ---- per-head attention, batched over the Bb batch elements ----
    # (static head loop; results written into a VMEM slab -> no concatenate)
    for h in range(num_heads):
        lo = h * D
        qh = q[:, :, lo:lo + D]                       # (Bb, T, D)
        kh = k[:, :, lo:lo + D]                       # (Bb, T, D)
        vh = v[:, :, lo:lo + D]                       # (Bb, T, D)

        # contraction over the last dims -> no materialized K transpose
        s = jnp.einsum('btd,bsd->bts', qh, kh,
                       preferred_element_type=jnp.float32)        # (Bb, T, T)
        s = s - jnp.max(s, axis=-1, keepdims=True)                # stable softmax
        e = jnp.exp(s)
        inv = pl.reciprocal(jnp.sum(e, axis=-1, keepdims=True), approx=True)
        # Apply the normalization to the (T, D) context instead of the (T, S)
        # probability matrix: fewer VALU multiplies when S > D.
        ctx_h = jnp.einsum('bts,bsd->btd', e, vh,
                           preferred_element_type=jnp.float32)    # (Bb, T, D)
        ctx_ref[:, :, lo:lo + D] = ctx_h * inv

    # ---- output projection (lane-dense, padded N = E_pad) ----
    ctx = ctx_ref[...].reshape(Bb * T, E)
    out = jnp.dot(ctx, wo_ref[...], preferred_element_type=jnp.float32)
    out = out + bo_ref[...]                           # (Bb*T, E_pad)
    E_pad = out_ref.shape[-1]
    out_ref[...] = out.reshape(Bb, T, E_pad).astype(out_ref.dtype)


def _rows_per_step(B: int, T: int, target_rows: int = 256) -> int:
    """Smallest divisor of B giving >= target_rows matmul rows per grid step."""
    for bb in range(1, B + 1):
        if B % bb == 0 and bb * T >= target_rows:
            return bb
    return B


def prepare_params(params, *, num_heads: int):
    """One-time parameter prep: fuse QKV, fold scaling, pad out-proj lane-dense."""
    E = params["wq"].shape[0]
    D = E // num_heads
    scaling = D ** -0.5
    # q_proj(x) * scaling == x @ (Wq * s) + bq * s  -> fold into constants
    wqkv = jnp.concatenate(
        [params["wq"] * scaling, params["wk"], params["wv"]], axis=1)   # (E, 3E)
    bqkv = jnp.concatenate(
        [params["bq"] * scaling, params["bk"], params["bv"]], axis=1)   # (1, 3E)
    # pad output projection columns to a multiple of 128 -> unmasked stores
    E_pad = ((E + 127) // 128) * 128
    pad = E_pad - E
    wo_p = jnp.pad(params["wo"], ((0, 0), (0, pad)))                    # (E, E_pad)
    bo_p = jnp.pad(params["bo"], ((0, 0), (0, pad)))                    # (1, E_pad)
    return {"wqkv": wqkv, "bqkv": bqkv, "wo_p": wo_p, "bo_p": bo_p}


def bart_attention(hidden_states, prepared, *, num_heads: int):
    """hidden_states: (B, T, E) float32; prepared: output of prepare_params."""
    B, T, E = hidden_states.shape
    wqkv, bqkv = prepared["wqkv"], prepared["bqkv"]
    wo_p, bo_p = prepared["wo_p"], prepared["bo_p"]
    E_pad = wo_p.shape[1]

    Bb = _rows_per_step(B, T)
    grid = (B // Bb,)
    kernel = functools.partial(_bart_attn_kernel, num_heads=num_heads)

    # TODO(synk): for real BART sizes (T ~ 1024, E ~ 768/1024) tile the attention
    # flash-style over (q-tile, kv-tile), single-buffer the invariant weight
    # blocks, and size vmem_limit_bytes per TPU generation. Optionally cast
    # weights/activations to bf16 (f32 accumulation) for MXU-native matmuls.
    out_padded = pl.pallas_call(
        kernel,
        out_shape=jax.ShapeDtypeStruct((B, T, E_pad), hidden_states.dtype),
        grid=grid,
        in_specs=[
            pl.BlockSpec((Bb, T, E), lambda i: (i, 0, 0)),    # hidden_states
            pl.BlockSpec((E, 3 * E), lambda i: (0, 0)),       # fused Wqkv
            pl.BlockSpec((1, 3 * E), lambda i: (0, 0)),       # fused bqkv
            pl.BlockSpec((E, E_pad), lambda i: (0, 0)),       # Wo (padded)
            pl.BlockSpec((1, E_pad), lambda i: (0, 0)),       # bo (padded)
        ],
        out_specs=pl.BlockSpec((Bb, T, E_pad), lambda i: (i, 0, 0)),
        scratch_shapes=[pltpu.VMEM((Bb, T, E), jnp.float32)],  # ctx slab
        compiler_params=pltpu.CompilerParams(
            dimension_semantics=("parallel",)),
    )(hidden_states, wqkv, bqkv, wo_p, bo_p)

    return out_padded[..., :E]


def _reference(hidden_states, params, *, num_heads: int):
    """Pure-JAX mirror of the PyTorch forward (self-attention, no mask, eval)."""
    B, T, E = hidden_states.shape
    D = E // num_heads
    scaling = D ** -0.5

    def lin(x, w, b):
        return x @ w + b

    q = lin(hidden_states, params["wq"], params["bq"]) * scaling
    k = lin(hidden_states, params["wk"], params["bk"])
    v = lin(hidden_states, params["wv"], params["bv"])

    def split(t):  # (B,T,E) -> (B,H,T,D)
        return t.reshape(B, T, num_heads, D).transpose(0, 2, 1, 3)

    q, k, v = split(q), split(k), split(v)
    w = jnp.einsum("bhtd,bhsd->bhts", q, k)
    w = jax.nn.softmax(w, axis=-1)
    ctx = jnp.einsum("bhts,bhsd->bhtd", w, v)
    ctx = ctx.transpose(0, 2, 1, 3).reshape(B, T, E)
    return lin(ctx, params["wo"], params["bo"])


def init_params(key, embed_dim: int):
    ks = jax.random.split(key, 8)
    scale = 1.0 / jnp.sqrt(embed_dim)

    def w(k):
        # Stored as (in, out): equivalent to PyTorch's W.T for y = x @ W.T + b.
        return (jax.random.uniform(k, (embed_dim, embed_dim), jnp.float32,
                                   minval=-1.0, maxval=1.0) * scale)

    def b(k):
        return (jax.random.uniform(k, (1, embed_dim), jnp.float32,
                                   minval=-1.0, maxval=1.0) * scale)

    return {
        "wq": w(ks[0]), "bq": b(ks[1]),
        "wk": w(ks[2]), "bk": b(ks[3]),
        "wv": w(ks[4]), "bv": b(ks[5]),
        "wo": w(ks[6]), "bo": b(ks[7]),
    }


if __name__ == "__main__":
    # Small shapes consistent with the module's Batch x Time x Channel forward.
    B, T, E, H = 2, 8, 32, 4

    key = jax.random.PRNGKey(0)
    k_x, k_p = jax.random.split(key)
    hidden_states = jax.random.normal(k_x, (B, T, E), jnp.float32)
    params = init_params(k_p, E)
    prepared = prepare_params(params, num_heads=H)

    out = bart_attention(hidden_states, prepared, num_heads=H)
    out = jax.block_until_ready(out)

    ref = _reference(hidden_states, params, num_heads=H)
    assert out.shape == (B, T, E)
    # Tolerance loosened (vs 1e-5) because of pl.reciprocal(approx=True) in softmax.
    assert jnp.allclose(out, ref, atol=2e-2, rtol=2e-2), "mismatch vs reference"

    # TODO(synk): attention_mask / layer_head_mask / past_key_value /
    # cross-attention / training-mode dropout / output_attentions branches are
    # not exercised (module defaults, eval mode), so only the main
    # self-attention path is implemented in the kernel.
    print("KERNEL_OK")
</pallas_src>

<mosaic_0001>
module attributes {stable_mosaic.version = 11 : i64} {
  func.func @_bart_attn_kernel(%arg0: i32, %arg1: memref<2x8x32xf32, #tpu.memory_space<vmem>>, %arg2: memref<32x96xf32, #tpu.memory_space<vmem>>, %arg3: memref<1x96xf32, #tpu.memory_space<vmem>>, %arg4: memref<32x128xf32, #tpu.memory_space<vmem>>, %arg5: memref<1x128xf32, #tpu.memory_space<vmem>>, %arg6: memref<2x8x128xf32, #tpu.memory_space<vmem>>, %arg7: memref<2x8x32xf32, #tpu.memory_space<vmem>>) attributes {dimension_semantics = [#tpu.dimension_semantics<parallel>], iteration_bounds = array<i64: 1>, scalar_prefetch = 0 : i64, scratch_operands = 1 : i64, tpu.core_type = #tpu.core_type<tc>, window_params = [{transform_indices = @transform_0, window_bounds = array<i64: 2, 8, 32>}, {pipeline_mode = #tpu.pipeline_mode<synchronous>, transform_indices = @transform_1, window_bounds = array<i64: 32, 96>}, {pipeline_mode = #tpu.pipeline_mode<synchronous>, transform_indices = @transform_2, window_bounds = array<i64: 1, 96>}, {pipeline_mode = #tpu.pipeline_mode<synchronous>, transform_indices = @transform_3, window_bounds = array<i64: 32, 128>}, {pipeline_mode = #tpu.pipeline_mode<synchronous>, transform_indices = @transform_4, window_bounds = array<i64: 1, 128>}, {transform_indices = @transform_5, window_bounds = array<i64: 2, 8, 128>}]} {
    %c0 = arith.constant 0 : index
    %c0_0 = arith.constant 0 : index
    %c0_1 = arith.constant 0 : index
    %0 = vector.load %arg1[%c0, %c0_0, %c0_1] : memref<2x8x32xf32, #tpu.memory_space<vmem>>, vector<2x8x32xf32>
    %1 = vector.shape_cast %0 : vector<2x8x32xf32> to vector<16x32xf32>
    %c0_2 = arith.constant 0 : index
    %c0_3 = arith.constant 0 : index
    %2 = vector.load %arg2[%c0_2, %c0_3] : memref<32x96xf32, #tpu.memory_space<vmem>>, vector<32x96xf32>
    %cst = arith.constant dense<0.000000e+00> : vector<16x96xf32>
    %3 = tpu.matmul %1, %2, %cst {dimension_numbers = #tpu.dot_dimension_numbers<[1], [0], [0], [1], [0, 0, 1, 1], [], []>} : vector<16x32xf32>, vector<32x96xf32>, vector<16x96xf32> -> vector<16x96xf32>
    %c0_4 = arith.constant 0 : index
    %c0_5 = arith.constant 0 : index
    %4 = vector.load %arg3[%c0_4, %c0_5] : memref<1x96xf32, #tpu.memory_space<vmem>>, vector<1x96xf32>
    %5 = vector.broadcast %4 : vector<1x96xf32> to vector<16x96xf32>
    %6 = arith.addf %3, %5 : vector<16x96xf32>
    %7 = vector.extract_strided_slice %6 {offsets = [0, 0], sizes = [16, 32], strides = [1, 1]} : vector<16x96xf32> to vector<16x32xf32>
    %8 = vector.shape_cast %7 : vector<16x32xf32> to vector<2x8x32xf32>
    %9 = vector.extract_strided_slice %6 {offsets = [0, 32], sizes = [16, 32], strides = [1, 1]} : vector<16x96xf32> to vector<16x32xf32>
    %10 = vector.shape_cast %9 : vector<16x32xf32> to vector<2x8x32xf32>
    %11 = vector.extract_strided_slice %6 {offsets = [0, 64], sizes = [16, 32], strides = [1, 1]} : vector<16x96xf32> to vector<16x32xf32>
    %12 = vector.shape_cast %11 : vector<16x32xf32> to vector<2x8x32xf32>
    %13 = vector.extract_strided_slice %8 {offsets = [0, 0, 0], sizes = [2, 8, 8], strides = [1, 1, 1]} : vector<2x8x32xf32> to vector<2x8x8xf32>
    %14 = vector.extract_strided_slice %10 {offsets = [0, 0, 0], sizes = [2, 8, 8], strides = [1, 1, 1]} : vector<2x8x32xf32> to vector<2x8x8xf32>
    %15 = vector.extract_strided_slice %12 {offsets = [0, 0, 0], sizes = [2, 8, 8], strides = [1, 1, 1]} : vector<2x8x32xf32> to vector<2x8x8xf32>
    "tpu.trace_start"() <{level = 10 : i32, message = "btd,bsd->bts"}> : () -> ()
    %cst_6 = arith.constant dense<0.000000e+00> : vector<2x8x8xf32>
    %16 = tpu.matmul %13, %14, %cst_6 {dimension_numbers = #tpu.dot_dimension_numbers<[2], [2], [1], [1], [0, 0, 0, 1, 1, 1], [0], [0]>} : vector<2x8x8xf32>, vector<2x8x8xf32>, vector<2x8x8xf32> -> vector<2x8x8xf32>
    "tpu.trace_stop"() : () -> ()
    %cst_7 = arith.constant dense<0xFF800000> : vector<2x8xf32>
    %17 = vector.multi_reduction <maximumf>, %16, %cst_7 [2] : vector<2x8x8xf32> to vector<2x8xf32>
    %18 = vector.shape_cast %17 : vector<2x8xf32> to vector<2x8x1xf32>
    %19 = vector.broadcast %18 : vector<2x8x1xf32> to vector<2x8x8xf32>
    %20 = arith.subf %16, %19 : vector<2x8x8xf32>
    %21 = math.exp %20 : vector<2x8x8xf32>
    %cst_8 = arith.constant dense<0.000000e+00> : vector<2x8xf32>
    %22 = vector.multi_reduction <add>, %21, %cst_8 [2] : vector<2x8x8xf32> to vector<2x8xf32>
    %23 = vector.shape_cast %22 : vector<2x8xf32> to vector<2x8x1xf32>
    %24 = tpu.reciprocal %23 {approx = true} : vector<2x8x1xf32> -> vector<2x8x1xf32>
    "tpu.trace_start"() <{level = 10 : i32, message = "bts,bsd->btd"}> : () -> ()
    %cst_9 = arith.constant dense<0.000000e+00> : vector<2x8x8xf32>
    %25 = tpu.matmul %21, %15, %cst_9 {dimension_numbers = #tpu.dot_dimension_numbers<[2], [1], [1], [2], [0, 0, 0, 1, 1, 2], [0], [0]>} : vector<2x8x8xf32>, vector<2x8x8xf32>, vector<2x8x8xf32> -> vector<2x8x8xf32>
    "tpu.trace_stop"() : () -> ()
    %26 = vector.broadcast %24 : vector<2x8x1xf32> to vector<2x8x8xf32>
    %27 = arith.mulf %25, %26 : vector<2x8x8xf32>
    %c0_10 = arith.constant 0 : index
    %c0_11 = arith.constant 0 : index
    %c0_12 = arith.constant 0 : index
    %28 = vector.load %arg7[%c0_10, %c0_11, %c0_12] : memref<2x8x32xf32, #tpu.memory_space<vmem>>, vector<2x8x8xf32>
    tpu.vector_store %arg7[%c0_10, %c0_11, %c0_12], %27 {strides = array<i32>} : memref<2x8x32xf32, #tpu.memory_space<vmem>>, vector<2x8x8xf32>,
    %29 = vector.extract_strided_slice %8 {offsets = [0, 0, 8], sizes = [2, 8, 8], strides = [1, 1, 1]} : vector<2x8x32xf32> to vector<2x8x8xf32>
    %30 = vector.extract_strided_slice %10 {offsets = [0, 0, 8], sizes = [2, 8, 8], strides = [1, 1, 1]} : vector<2x8x32xf32> to vector<2x8x8xf32>
    %31 = vector.extract_strided_slice %12 {offsets = [0, 0, 8], sizes = [2, 8, 8], strides = [1, 1, 1]} : vector<2x8x32xf32> to vector<2x8x8xf32>
    "tpu.trace_start"() <{level = 10 : i32, message = "btd,bsd->bts"}> : () -> ()
    %cst_13 = arith.constant dense<0.000000e+00> : vector<2x8x8xf32>
    %32 = tpu.matmul %29, %30, %cst_13 {dimension_numbers = #tpu.dot_dimension_numbers<[2], [2], [1], [1], [0, 0, 0, 1, 1, 1], [0], [0]>} : vector<2x8x8xf32>, vector<2x8x8xf32>, vector<2x8x8xf32> -> vector<2x8x8xf32>
    "tpu.trace_stop"() : () -> ()
    %cst_14 = arith.constant dense<0xFF800000> : vector<2x8xf32>
    %33 = vector.multi_reduction <maximumf>, %32, %cst_14 [2] : vector<2x8x8xf32> to vector<2x8xf32>
    %34 = vector.shape_cast %33 : vector<2x8xf32> to vector<2x8x1xf32>
    %35 = vector.broadcast %34 : vector<2x8x1xf32> to vector<2x8x8xf32>
    %36 = arith.subf %32, %35 : vector<2x8x8xf32>
    %37 = math.exp %36 : vector<2x8x8xf32>
    %cst_15 = arith.constant dense<0.000000e+00> : vector<2x8xf32>
    %38 = vector.multi_reduction <add>, %37, %cst_15 [2] : vector<2x8x8xf32> to vector<2x8xf32>
    %39 = vector.shape_cast %38 : vector<2x8xf32> to vector<2x8x1xf32>
    %40 = tpu.reciprocal %39 {approx = true} : vector<2x8x1xf32> -> vector<2x8x1xf32>
    "tpu.trace_start"() <{level = 10 : i32, message = "bts,bsd->btd"}> : () -> ()
    %cst_16 = arith.constant dense<0.000000e+00> : vector<2x8x8xf32>
    %41 = tpu.matmul %37, %31, %cst_16 {dimension_numbers = #tpu.dot_dimension_numbers<[2], [1], [1], [2], [0, 0, 0, 1, 1, 2], [0], [0]>} : vector<2x8x8xf32>, vector<2x8x8xf32>, vector<2x8x8xf32> -> vector<2x8x8xf32>
    "tpu.trace_stop"() : () -> ()
    %42 = vector.broadcast %40 : vector<2x8x1xf32> to vector<2x8x8xf32>
    %43 = arith.mulf %41, %42 : vector<2x8x8xf32>
    %c0_17 = arith.constant 0 : index
    %c0_18 = arith.constant 0 : index
    %c8 = arith.constant 8 : index
    %44 = vector.load %arg7[%c0_17, %c0_18, %c8] : memref<2x8x32xf32, #tpu.memory_space<vmem>>, vector<2x8x8xf32>
    tpu.vector_store %arg7[%c0_17, %c0_18, %c8], %43 {strides = array<i32>} : memref<2x8x32xf32, #tpu.memory_space<vmem>>, vector<2x8x8xf32>,
    %45 = vector.extract_strided_slice %8 {offsets = [0, 0, 16], sizes = [2, 8, 8], strides = [1, 1, 1]} : vector<2x8x32xf32> to vector<2x8x8xf32>
    %46 = vector.extract_strided_slice %10 {offsets = [0, 0, 16], sizes = [2, 8, 8], strides = [1, 1, 1]} : vector<2x8x32xf32> to vector<2x8x8xf32>
    %47 = vector.extract_strided_slice %12 {offsets = [0, 0, 16], sizes = [2, 8, 8], strides = [1, 1, 1]} : vector<2x8x32xf32> to vector<2x8x8xf32>
    "tpu.trace_start"() <{level = 10 : i32, message = "btd,bsd->bts"}> : () -> ()
    %cst_19 = arith.constant dense<0.000000e+00> : vector<2x8x8xf32>
    %48 = tpu.matmul %45, %46, %cst_19 {dimension_numbers = #tpu.dot_dimension_numbers<[2], [2], [1], [1], [0, 0, 0, 1, 1, 1], [0], [0]>} : vector<2x8x8xf32>, vector<2x8x8xf32>, vector<2x8x8xf32> -> vector<2x8x8xf32>
    "tpu.trace_stop"() : () -> ()
    %cst_20 = arith.constant dense<0xFF800000> : vector<2x8xf32>
    %49 = vector.multi_reduction <maximumf>, %48, %cst_20 [2] : vector<2x8x8xf32> to vector<2x8xf32>
    %50 = vector.shape_cast %49 : vector<2x8xf32> to vector<2x8x1xf32>
    %51 = vector.broadcast %50 : vector<2x8x1xf32> to vector<2x8x8xf32>
    %52 = arith.subf %48, %51 : vector<2x8x8xf32>
    %53 = math.exp %52 : vector<2x8x8xf32>
    %cst_21 = arith.constant dense<0.000000e+00> : vector<2x8xf32>
    %54 = vector.multi_reduction <add>, %53, %cst_21 [2] : vector<2x8x8xf32> to vector<2x8xf32>
    %55 = vector.shape_cast %54 : vector<2x8xf32> to vector<2x8x1xf32>
    %56 = tpu.reciprocal %55 {approx = true} : vector<2x8x1xf32> -> vector<2x8x1xf32>
    "tpu.trace_start"() <{level = 10 : i32, message = "bts,bsd->btd"}> : () -> ()
    %cst_22 = arith.constant dense<0.000000e+00> : vector<2x8x8xf32>
    %57 = tpu.matmul %53, %47, %cst_22 {dimension_numbers = #tpu.dot_dimension_numbers<[2], [1], [1], [2], [0, 0, 0, 1, 1, 2], [0], [0]>} : vector<2x8x8xf32>, vector<2x8x8xf32>, vector<2x8x8xf32> -> vector<2x8x8xf32>
    "tpu.trace_stop"() : () -> ()
    %58 = vector.broadcast %56 : vector<2x8x1xf32> to vector<2x8x8xf32>
    %59 = arith.mulf %57, %58 : vector<2x8x8xf32>
    %c0_23 = arith.constant 0 : index
    %c0_24 = arith.constant 0 : index
    %c16 = arith.constant 16 : index
    %60 = vector.load %arg7[%c0_23, %c0_24, %c16] : memref<2x8x32xf32, #tpu.memory_space<vmem>>, vector<2x8x8xf32>
    tpu.vector_store %arg7[%c0_23, %c0_24, %c16], %59 {strides = array<i32>} : memref<2x8x32xf32, #tpu.memory_space<vmem>>, vector<2x8x8xf32>,
    %61 = vector.extract_strided_slice %8 {offsets = [0, 0, 24], sizes = [2, 8, 8], strides = [1, 1, 1]} : vector<2x8x32xf32> to vector<2x8x8xf32>
    %62 = vector.extract_strided_slice %10 {offsets = [0, 0, 24], sizes = [2, 8, 8], strides = [1, 1, 1]} : vector<2x8x32xf32> to vector<2x8x8xf32>
    %63 = vector.extract_strided_slice %12 {offsets = [0, 0, 24], sizes = [2, 8, 8], strides = [1, 1, 1]} : vector<2x8x32xf32> to vector<2x8x8xf32>
    "tpu.trace_start"() <{level = 10 : i32, message = "btd,bsd->bts"}> : () -> ()
    %cst_25 = arith.constant dense<0.000000e+00> : vector<2x8x8xf32>
    %64 = tpu.matmul %61, %62, %cst_25 {dimension_numbers = #tpu.dot_dimension_numbers<[2], [2], [1], [1], [0, 0, 0, 1, 1, 1], [0], [0]>} : vector<2x8x8xf32>, vector<2x8x8xf32>, vector<2x8x8xf32> -> vector<2x8x8xf32>
    "tpu.trace_stop"() : () -> ()
    %cst_26 = arith.constant dense<0xFF800000> : vector<2x8xf32>
    %65 = vector.multi_reduction <maximumf>, %64, %cst_26 [2] : vector<2x8x8xf32> to vector<2x8xf32>
    %66 = vector.shape_cast %65 : vector<2x8xf32> to vector<2x8x1xf32>
    %67 = vector.broadcast %66 : vector<2x8x1xf32> to vector<2x8x8xf32>
    %68 = arith.subf %64, %67 : vector<2x8x8xf32>
    %69 = math.exp %68 : vector<2x8x8xf32>
    %cst_27 = arith.constant dense<0.000000e+00> : vector<2x8xf32>
    %70 = vector.multi_reduction <add>, %69, %cst_27 [2] : vector<2x8x8xf32> to vector<2x8xf32>
    %71 = vector.shape_cast %70 : vector<2x8xf32> to vector<2x8x1xf32>
    %72 = tpu.reciprocal %71 {approx = true} : vector<2x8x1xf32> -> vector<2x8x1xf32>
    "tpu.trace_start"() <{level = 10 : i32, message = "bts,bsd->btd"}> : () -> ()
    %cst_28 = arith.constant dense<0.000000e+00> : vector<2x8x8xf32>
    %73 = tpu.matmul %69, %63, %cst_28 {dimension_numbers = #tpu.dot_dimension_numbers<[2], [1], [1], [2], [0, 0, 0, 1, 1, 2], [0], [0]>} : vector<2x8x8xf32>, vector<2x8x8xf32>, vector<2x8x8xf32> -> vector<2x8x8xf32>
    "tpu.trace_stop"() : () -> ()
    %74 = vector.broadcast %72 : vector<2x8x1xf32> to vector<2x8x8xf32>
    %75 = arith.mulf %73, %74 : vector<2x8x8xf32>
    %c0_29 = arith.constant 0 : index
    %c0_30 = arith.constant 0 : index
    %c24 = arith.constant 24 : index
    %76 = vector.load %arg7[%c0_29, %c0_30, %c24] : memref<2x8x32xf32, #tpu.memory_space<vmem>>, vector<2x8x8xf32>
    tpu.vector_store %arg7[%c0_29, %c0_30, %c24], %75 {strides = array<i32>} : memref<2x8x32xf32, #tpu.memory_space<vmem>>, vector<2x8x8xf32>,
    %c0_31 = arith.constant 0 : index
    %c0_32 = arith.constant 0 : index
    %c0_33 = arith.constant 0 : index
    %77 = vector.load %arg7[%c0_31, %c0_32, %c0_33] : memref<2x8x32xf32, #tpu.memory_space<vmem>>, vector<2x8x32xf32>
    %78 = vector.shape_cast %77 : vector<2x8x32xf32> to vector<16x32xf32>
    %c0_34 = arith.constant 0 : index
    %c0_35 = arith.constant 0 : index
    %79 = vector.load %arg4[%c0_34, %c0_35] : memref<32x128xf32, #tpu.memory_space<vmem>>, vector<32x128xf32>
    %cst_36 = arith.constant dense<0.000000e+00> : vector<16x128xf32>
    %80 = tpu.matmul %78, %79, %cst_36 {dimension_numbers = #tpu.dot_dimension_numbers<[1], [0], [0], [1], [0, 0, 1, 1], [], []>} : vector<16x32xf32>, vector<32x128xf32>, vector<16x128xf32> -> vector<16x128xf32>
    %c0_37 = arith.constant 0 : index
    %c0_38 = arith.constant 0 : index
    %81 = vector.load %arg5[%c0_37, %c0_38] : memref<1x128xf32, #tpu.memory_space<vmem>>, vector<1x128xf32>
    %82 = vector.broadcast %81 : vector<1x128xf32> to vector<16x128xf32>
    %83 = arith.addf %80, %82 : vector<16x128xf32>
    %84 = vector.shape_cast %83 : vector<16x128xf32> to vector<2x8x128xf32>
    %c0_39 = arith.constant 0 : index
    %c0_40 = arith.constant 0 : index
    %c0_41 = arith.constant 0 : index
    %85 = vector.load %arg6[%c0_39, %c0_40, %c0_41] : memref<2x8x128xf32, #tpu.memory_space<vmem>>, vector<2x8x128xf32>
    tpu.vector_store %arg6[%c0_39, %c0_40, %c0_41], %84 {strides = array<i32>} : memref<2x8x128xf32, #tpu.memory_space<vmem>>, vector<2x8x128xf32>,
    return
  }
  func.func @transform_0(%arg0: i32) -> (i32, i32, i32) {
    %c0_i32 = arith.constant 0 : i32
    %c0_i32_0 = arith.constant 0 : i32
    %c0_i32_1 = arith.constant 0 : i32
    return %arg0, %c0_i32, %c0_i32_0 : i32, i32, i32
  }
  func.func @transform_1(%arg0: i32) -> (i32, i32) {
    %c0_i32 = arith.constant 0 : i32
    %c0_i32_0 = arith.constant 0 : i32
    %c0_i32_1 = arith.constant 0 : i32
    return %c0_i32, %c0_i32_0 : i32, i32
  }
  func.func @transform_2(%arg0: i32) -> (i32, i32) {
    %c0_i32 = arith.constant 0 : i32
    %c0_i32_0 = arith.constant 0 : i32
    %c0_i32_1 = arith.constant 0 : i32
    return %c0_i32, %c0_i32_0 : i32, i32
  }
  func.func @transform_3(%arg0: i32) -> (i32, i32) {
    %c0_i32 = arith.constant 0 : i32
    %c0_i32_0 = arith.constant 0 : i32
    %c0_i32_1 = arith.constant 0 : i32
    return %c0_i32, %c0_i32_0 : i32, i32
  }
  func.func @transform_4(%arg0: i32) -> (i32, i32) {
    %c0_i32 = arith.constant 0 : i32
    %c0_i32_0 = arith.constant 0 : i32
    %c0_i32_1 = arith.constant 0 : i32
    return %c0_i32, %c0_i32_0 : i32, i32
  }
  func.func @transform_5(%arg0: i32) -> (i32, i32, i32) {
    %c0_i32 = arith.constant 0 : i32
    %c0_i32_0 = arith.constant 0 : i32
    %c0_i32_1 = arith.constant 0 : i32
    return %arg0, %c0_i32, %c0_i32_0 : i32, i32, i32
  }
}

</mosaic_0001>

<llo_original>
// kernel: tpu_custom_call.1
$region0: #{tpu_custom_call.1}
  #allocation0 [shape = 'u32[]', space=smem, size = 0x4, offset = 0x4, fixed_abs, tag = 'smem constant byte address 0x4 - core index']
  #allocation1 [shape = 'u32[72,128]{1,0:T(1,128)}', space=vmem, size = 0x9000, scoped, tag = 'internal scratch']
  #allocation2 [shape = 'f32[2,8,32]{2,1,0:T(8,128)}', space=vmem, size = 0x2000, scoped, tag = 'scratch operand']
  %s0 = inlined_call_operand.hbm [shape: f32[2,8,32], index: 0, kind: input, shape index: {}]
  %s1 = inlined_call_operand.hbm [shape: f32[32,96], index: 1, kind: input, shape index: {}]
  %s2 = inlined_call_operand.vmem [shape: f32[1,96], index: 2, kind: input, shape index: {}]
  %s3 = inlined_call_operand.hbm [shape: f32[32,128], index: 3, kind: input, shape index: {}]
  %s4 = inlined_call_operand.vmem [shape: f32[1,128], index: 4, kind: input, shape index: {}]
  %s5 = inlined_call_operand.hbm [shape: f32[2,8,128], index: 5, kind: output, shape index: {}]
  %s6 = sld [smem:[#allocation0]]
  $region42: #{tpu_custom_call.1} parent=0
    _
  %s8 = ssub.s32 1, %s6
  %s9 = scalar_select 0, %s8, %s6
  $region1: #{tpu_custom_call.1} parent=0
    #allocation3 [shape = 'u8[8192]{0}', space=vmem, size = 0x2000, scoped, tag = 'input window, operand 0, single buffered']
    #allocation4 [shape = 's32[1]{0}', space=sflag, size = 0x4, scoped, tag = 'scoped memory for tpu_custom_call.1']
    #allocation5 [shape = 's32[1]{0}', space=sflag, size = 0x4, scoped, tag = 'scoped memory for tpu_custom_call.1']
    #allocation6 [shape = 'u8[16384]{0}', space=vmem, size = 0x4000, scoped, tag = 'input window, operand 1, single buffered']
    #allocation7 [shape = 's32[1]{0}', space=sflag, size = 0x4, scoped, tag = 'scoped memory for tpu_custom_call.1']
    #allocation8 [shape = 'u8[16384]{0}', space=vmem, size = 0x4000, scoped, tag = 'input window, operand 3, single buffered']
    #allocation9 [shape = 'u8[8192]{0}', space=vmem, size = 0x2000, scoped, tag = 'output window, operand 0, single buffered']
    %10 = vsyncpa [#allocation4], 0
    %11 = vsyncpa [#allocation7], 0
    %12 = vsyncpa [#allocation5], 0
    // Predicated region
    $region2: #{tpu_custom_call.1} parent=1 // pred_check
      _
    $region3: #{tpu_custom_call.1} parent=1 // pred_check_branch
      %14 = sbr.rel (0) target = $region5
    $region4: #{tpu_custom_call.1} parent=1 // pred_region
      %16 = vsyncadd [#allocation4], 0
      %s17 = sshll.u32 %s0, 4
      %s18 = int_to_ptr.hbm [resolvable:$true] %s17
      %s19 = sshll.u32 [#allocation3], 4
      %s20 = int_to_ptr.vmem [resolvable:$true] %s19
      %25 = dma.hbm_to_vmem [thread:$0]  %s18, 256, %s20, [#allocation4], 128, 128, 8
    $region5: #{tpu_custom_call.1} parent=1 // pred_fallthru
      _
    // Predicated region
    $region6: #{tpu_custom_call.1} parent=1 // pred_check
      _
    $region7: #{tpu_custom_call.1} parent=1 // pred_check_branch
      %27 = sbr.rel (0) target = $region9
    $region8: #{tpu_custom_call.1} parent=1 // pred_region
      %29 = vsyncadd [#allocation7], 0
      %s30 = sshll.u32 %s1, 4
      %s31 = int_to_ptr.hbm [resolvable:$true] %s30
      %s32 = sshll.u32 [#allocation6], 4
      %s33 = int_to_ptr.vmem [resolvable:$true] %s32
      %38 = dma.hbm_to_vmem [thread:$0]  %s31, 512, %s33, [#allocation7], 128, 128, 8
    $region9: #{tpu_custom_call.1} parent=1 // pred_fallthru
      _
    // Predicated region
    $region10: #{tpu_custom_call.1} parent=1 // pred_check
      _
    $region11: #{tpu_custom_call.1} parent=1 // pred_check_branch
      %40 = sbr.rel (0) target = $region13
    $region12: #{tpu_custom_call.1} parent=1 // pred_region
      _
    $region13: #{tpu_custom_call.1} parent=1 // pred_fallthru
      _
    // Predicated region
    $region14: #{tpu_custom_call.1} parent=1 // pred_check
      _
    $region15: #{tpu_custom_call.1} parent=1 // pred_check_branch
      %42 = sbr.rel (0) target = $region17
    $region16: #{tpu_custom_call.1} parent=1 // pred_region
      %44 = vsyncadd [#allocation7], 0
      %s45 = sshll.u32 %s3, 4
      %s46 = int_to_ptr.hbm [resolvable:$true] %s45
      %s47 = sshll.u32 [#allocation8], 4
      %s48 = int_to_ptr.vmem [resolvable:$true] %s47
      %53 = dma.hbm_to_vmem [thread:$0]  %s46, 512, %s48, [#allocation7], 128, 128, 8
    $region17: #{tpu_custom_call.1} parent=1 // pred_fallthru
      _
    // Predicated region
    $region18: #{tpu_custom_call.1} parent=1 // pred_check
      _
    $region19: #{tpu_custom_call.1} parent=1 // pred_check_branch
      %55 = sbr.rel (0) target = $region21
    $region20: #{tpu_custom_call.1} parent=1 // pred_region
      _
    $region21: #{tpu_custom_call.1} parent=1 // pred_fallthru
      _
    // Predicated region
    $region22: #{tpu_custom_call.1} parent=1 // pred_check
      _
    $region23: #{tpu_custom_call.1} parent=1 // pred_check_branch
      %57 = sbr.rel (0) target = $region25
    $region24: #{tpu_custom_call.1} parent=1 // pred_region
      %59 = dma.done [#allocation4], 256
    $region25: #{tpu_custom_call.1} parent=1 // pred_fallthru
      _
    // Predicated region
    $region26: #{tpu_custom_call.1} parent=1 // pred_check
      _
    $region27: #{tpu_custom_call.1} parent=1 // pred_check_branch
      %61 = sbr.rel (0) target = $region29
    $region28: #{tpu_custom_call.1} parent=1 // pred_region
      %63 = dma.done [#allocation7], 512
    $region29: #{tpu_custom_call.1} parent=1 // pred_fallthru
      _
    // Predicated region
    $region30: #{tpu_custom_call.1} parent=1 // pred_check
      _
    $region31: #{tpu_custom_call.1} parent=1 // pred_check_branch
      %65 = sbr.rel (0) target = $region33
    $region32: #{tpu_custom_call.1} parent=1 // pred_region
      %67 = dma.done [#allocation7], 512
    $region33: #{tpu_custom_call.1} parent=1 // pred_fallthru
      _
    %v68 = vld [vmem:[#allocation3] sm:$0xff]
    %v69 = vld [vmem:[#allocation3 + $0x8] sm:$0xff]
    %v70 = vld [vmem:[#allocation6] sm:$0xff]
    %v71 = vld [vmem:[#allocation6 + $0x8] sm:$0xff]
    %v72 = vld [vmem:[#allocation6 + $0x10] sm:$0xff]
    %v73 = vld [vmem:[#allocation6 + $0x18] sm:$0xff]
    %v74 = vld [vmem:[%s2] sm:$0x1]
    %v76 = vperm.slane %v74, 0
    %vm78 = vcmask 261120
    %v80 = vsel %vm78, %v68, 0
    %v83 = vsel %vm78, %v69, 0
    %85 = vmatpush.msra.mxu0 0.0
    %86 = vmatpush.msra.mxu0 0.0
    %87 = vmatpush.msra.mxu0 0.0
    %88 = vmatpush.msra.mxu0 0.0
    %89 = vmatpush.msra.mxu0 0.0
    %90 = vmatpush.msra.mxu0 0.0
    %91 = vmatpush.msra.mxu0 0.0
    %92 = vmatpush.msra.mxu0 0.0
    %93 = vmatpush.msra.mxu0 0.0
    %94 = vmatpush.msra.mxu0 0.0
    %95 = vmatpush.msra.mxu0 0.0
    %96 = vmatpush.msra.mxu0 0.0
    %97 = vmatpush.msra.mxu0 %v73
    %98 = vmatpush.msra.mxu0 %v72
    %99 = vmatpush.msra.mxu0 %v71
    %100 = vmatpush.msra.mxu0 %v70
    %101 = vmatmul.f32.gmra.mxu0 %v80
    %v102 = vpop.f32.mrf.mxu0
    %v103 = vadd.f32 %v76, %v102
    %104 = vmatmul.f32.gmra.mxu0 %v83
    %v105 = vpop.f32.mrf.mxu0
    %v106 = vadd.f32 %v76, %v105
    %107 = vdwg.mxu0
    %109 = vrot.lane.b32.xlu0 %v103, 96
    %v110 = vpop.permute.xlu0 %109
    %vm111 = vcmask 64512
    %v112 = vsel %vm111, %v103, 0
    %v114 = vsel %vm111, %v110, 0
    %116 = vmatpush.xpose.msra.mxu0 0.0
    %117 = vmatpush.xpose.msra.mxu0 0.0
    %118 = vmatpush.xpose.msra.mxu0 0.0
    %119 = vmatpush.xpose.msra.mxu0 0.0
    %120 = vmatpush.xpose.msra.mxu0 0.0
    %121 = vmatpush.xpose.msra.mxu0 0.0
    %122 = vmatpush.xpose.msra.mxu0 0.0
    %123 = vmatpush.xpose.msra.mxu0 0.0
    %124 = vmatpush.xpose.msra.mxu0 0.0
    %125 = vmatpush.xpose.msra.mxu0 0.0
    %126 = vmatpush.xpose.msra.mxu0 0.0
    %127 = vmatpush.xpose.msra.mxu0 0.0
    %128 = vmatpush.xpose.msra.mxu0 0.0
    %129 = vmatpush.xpose.msra.mxu0 0.0
    %130 = vmatpush.xpose.msra.mxu0 0.0
    %131 = vmatpush.xpose.msra.mxu0 %v114
    %132 = vmatmul.f32.gmra.mxu0 %v112
    %v133 = vpop.f32.mrf.mxu0
    %v134 = vadd.f32 0.0, %v133
    %135 = vdwg.mxu0
    %137 = vrot.lane.b32.xlu0 %v106, 96
    %v138 = vpop.permute.xlu0 %137
    %v139 = vsel %vm111, %v106, 0
    %v141 = vsel %vm111, %v138, 0
    %143 = vmatpush.xpose.msra.mxu0 0.0
    %144 = vmatpush.xpose.msra.mxu0 0.0
    %145 = vmatpush.xpose.msra.mxu0 0.0
    %146 = vmatpush.xpose.msra.mxu0 0.0
    %147 = vmatpush.xpose.msra.mxu0 0.0
    %148 = vmatpush.xpose.msra.mxu0 0.0
    %149 = vmatpush.xpose.msra.mxu0 0.0
    %150 = vmatpush.xpose.msra.mxu0 0.0
    %151 = vmatpush.xpose.msra.mxu0 0.0
    %152 = vmatpush.xpose.msra.mxu0 0.0
    %153 = vmatpush.xpose.msra.mxu0 0.0
    %154 = vmatpush.xpose.msra.mxu0 0.0
    %155 = vmatpush.xpose.msra.mxu0 0.0
    %156 = vmatpush.xpose.msra.mxu0 0.0
    %157 = vmatpush.xpose.msra.mxu0 0.0
    %158 = vmatpush.xpose.msra.mxu0 %v141
    %159 = vmatmul.f32.gmra.mxu0 %v139
    %v160 = vpop.f32.mrf.mxu0
    %v161 = vadd.f32 0.0, %v160
    %162 = vdwg.mxu0
    %v163 = vsel %vm111, %v134, -inf
    %164 = vmax.xlane.f32.xlu0 %v163
    %v165 = vpop.xlane.xlu0 %164
    %v166 = vsel %vm111, %v161, -inf
    %167 = vmax.xlane.f32.xlu0 %v166
    %v168 = vpop.xlane.xlu0 %167
    %v169 = vsub.f32 %v134, %v165
    %v170 = vsub.f32 %v161, %v168
    %v171 = vmul.f32 %v169, 1.442695
    %v172 = vpow.pop %v171
    %v173 = vmul.f32 %v170, 1.442695
    %v174 = vpow.pop %v173
    %v175 = vsel %vm111, %v172, 0.0
    %176 = vadd.xlane.f32.xlu0 %v175
    %v177 = vpop.xlane.xlu0 %176
    %v178 = vsel %vm111, %v174, 0.0
    %179 = vadd.xlane.f32.xlu0 %v178
    %v180 = vpop.xlane.xlu0 %179
    %v181 = vrcp.pop %v177
    %v182 = vrcp.pop %v180
    %183 = vrot.lane.b32.xlu0 %v103, 64
    %v184 = vpop.permute.xlu0 %183
    %v187 = vsel %vm111, %v172, 0
    %189 = vmatpush.msra.mxu0 0.0
    %190 = vmatpush.msra.mxu0 0.0
    %191 = vmatpush.msra.mxu0 0.0
    %192 = vmatpush.msra.mxu0 0.0
    %193 = vmatpush.msra.mxu0 0.0
    %194 = vmatpush.msra.mxu0 0.0
    %195 = vmatpush.msra.mxu0 0.0
    %196 = vmatpush.msra.mxu0 0.0
    %197 = vmatpush.msra.mxu0 0.0
    %198 = vmatpush.msra.mxu0 0.0
    %199 = vmatpush.msra.mxu0 0.0
    %200 = vmatpush.msra.mxu0 0.0
    %201 = vmatpush.msra.mxu0 0.0
    %202 = vmatpush.msra.mxu0 0.0
    %203 = vmatpush.msra.mxu0 0.0
    %204 = vmatpush.msra.mxu0 %v184
    %205 = vmatmul.f32.gmra.mxu0 %v187
    %v206 = vpop.f32.mrf.mxu0
    %v207 = vadd.f32 0.0, %v206
    %208 = vdwg.mxu0
    %209 = vrot.lane.b32.xlu0 %v106, 64
    %v210 = vpop.permute.xlu0 %209
    %v213 = vsel %vm111, %v174, 0
    %215 = vmatpush.msra.mxu0 0.0
    %216 = vmatpush.msra.mxu0 0.0
    %217 = vmatpush.msra.mxu0 0.0
    %218 = vmatpush.msra.mxu0 0.0
    %219 = vmatpush.msra.mxu0 0.0
    %220 = vmatpush.msra.mxu0 0.0
    %221 = vmatpush.msra.mxu0 0.0
    %222 = vmatpush.msra.mxu0 0.0
    %223 = vmatpush.msra.mxu0 0.0
    %224 = vmatpush.msra.mxu0 0.0
    %225 = vmatpush.msra.mxu0 0.0
    %226 = vmatpush.msra.mxu0 0.0
    %227 = vmatpush.msra.mxu0 0.0
    %228 = vmatpush.msra.mxu0 0.0
    %229 = vmatpush.msra.mxu0 0.0
    %230 = vmatpush.msra.mxu0 %v210
    %231 = vmatmul.f32.gmra.mxu0 %v213
    %v232 = vpop.f32.mrf.mxu0
    %v233 = vadd.f32 0.0, %v232
    %234 = vdwg.mxu0
    %v235 = vmul.f32 %v207, %v181
    %v236 = vmul.f32 %v233, %v182
    %237 = vst.msk [vmem:[#allocation2] sm:$0xff] %vm111, %v235
    %238 = vst.msk [vmem:[#allocation2 + $0x8] sm:$0xff] %vm111, %v236
    %239 = vrot.lane.b32.xlu0 %v103, 120
    %v240 = vpop.permute.xlu0 %239
    %241 = vrot.lane.b32.xlu0 %v103, 88
    %v242 = vpop.permute.xlu0 %241
    %v243 = vsel %vm111, %v240, 0
    %v245 = vsel %vm111, %v242, 0
    %247 = vmatpush.xpose.msra.mxu0 0.0
    %248 = vmatpush.xpose.msra.mxu0 0.0
    %249 = vmatpush.xpose.msra.mxu0 0.0
    %250 = vmatpush.xpose.msra.mxu0 0.0
    %251 = vmatpush.xpose.msra.mxu0 0.0
    %252 = vmatpush.xpose.msra.mxu0 0.0
    %253 = vmatpush.xpose.msra.mxu0 0.0
    %254 = vmatpush.xpose.msra.mxu0 0.0
    %255 = vmatpush.xpose.msra.mxu0 0.0
    %256 = vmatpush.xpose.msra.mxu0 0.0
    %257 = vmatpush.xpose.msra.mxu0 0.0
    %258 = vmatpush.xpose.msra.mxu0 0.0
    %259 = vmatpush.xpose.msra.mxu0 0.0
    %260 = vmatpush.xpose.msra.mxu0 0.0
    %261 = vmatpush.xpose.msra.mxu0 0.0
    %262 = vmatpush.xpose.msra.mxu0 %v245
    %263 = vmatmul.f32.gmra.mxu0 %v243
    %v264 = vpop.f32.mrf.mxu0
    %v265 = vadd.f32 0.0, %v264
    %266 = vdwg.mxu0
    %267 = vrot.lane.b32.xlu0 %v106, 120
    %v268 = vpop.permute.xlu0 %267
    %269 = vrot.lane.b32.xlu0 %v106, 88
    %v270 = vpop.permute.xlu0 %269
    %v271 = vsel %vm111, %v268, 0
    %v273 = vsel %vm111, %v270, 0
    %275 = vmatpush.xpose.msra.mxu0 0.0
    %276 = vmatpush.xpose.msra.mxu0 0.0
    %277 = vmatpush.xpose.msra.mxu0 0.0
    %278 = vmatpush.xpose.msra.mxu0 0.0
    %279 = vmatpush.xpose.msra.mxu0 0.0
    %280 = vmatpush.xpose.msra.mxu0 0.0
    %281 = vmatpush.xpose.msra.mxu0 0.0
    %282 = vmatpush.xpose.msra.mxu0 0.0
    %283 = vmatpush.xpose.msra.mxu0 0.0
    %284 = vmatpush.xpose.msra.mxu0 0.0
    %285 = vmatpush.xpose.msra.mxu0 0.0
    %286 = vmatpush.xpose.msra.mxu0 0.0
    %287 = vmatpush.xpose.msra.mxu0 0.0
    %288 = vmatpush.xpose.msra.mxu0 0.0
    %289 = vmatpush.xpose.msra.mxu0 0.0
    %290 = vmatpush.xpose.msra.mxu0 %v273
    %291 = vmatmul.f32.gmra.mxu0 %v271
    %v292 = vpop.f32.mrf.mxu0
    %v293 = vadd.f32 0.0, %v292
    %294 = vdwg.mxu0
    %v295 = vsel %vm111, %v265, -inf
    %296 = vmax.xlane.f32.xlu0 %v295
    %v297 = vpop.xlane.xlu0 %296
    %v298 = vsel %vm111, %v293, -inf
    %299 = vmax.xlane.f32.xlu0 %v298
    %v300 = vpop.xlane.xlu0 %299
    %v301 = vsub.f32 %v265, %v297
    %v302 = vsub.f32 %v293, %v300
    %v303 = vmul.f32 %v301, 1.442695
    %v304 = vpow.pop %v303
    %v305 = vmul.f32 %v302, 1.442695
    %v306 = vpow.pop %v305
    %v307 = vsel %vm111, %v304, 0.0
    %308 = vadd.xlane.f32.xlu0 %v307
    %v309 = vpop.xlane.xlu0 %308
    %v310 = vsel %vm111, %v306, 0.0
    %311 = vadd.xlane.f32.xlu0 %v310
    %v312 = vpop.xlane.xlu0 %311
    %v313 = vrcp.pop %v309
    %v314 = vrcp.pop %v312
    %315 = vrot.lane.b32.xlu0 %v103, 56
    %v316 = vpop.permute.xlu0 %315
    %v319 = vsel %vm111, %v304, 0
    %321 = vmatpush.msra.mxu0 0.0
    %322 = vmatpush.msra.mxu0 0.0
    %323 = vmatpush.msra.mxu0 0.0
    %324 = vmatpush.msra.mxu0 0.0
    %325 = vmatpush.msra.mxu0 0.0
    %326 = vmatpush.msra.mxu0 0.0
    %327 = vmatpush.msra.mxu0 0.0
    %328 = vmatpush.msra.mxu0 0.0
    %329 = vmatpush.msra.mxu0 0.0
    %330 = vmatpush.msra.mxu0 0.0
    %331 = vmatpush.msra.mxu0 0.0
    %332 = vmatpush.msra.mxu0 0.0
    %333 = vmatpush.msra.mxu0 0.0
    %334 = vmatpush.msra.mxu0 0.0
    %335 = vmatpush.msra.mxu0 0.0
    %336 = vmatpush.msra.mxu0 %v316
    %337 = vmatmul.f32.gmra.mxu0 %v319
    %v338 = vpop.f32.mrf.mxu0
    %v339 = vadd.f32 0.0, %v338
    %340 = vdwg.mxu0
    %341 = vrot.lane.b32.xlu0 %v106, 56
    %v342 = vpop.permute.xlu0 %341
    %v345 = vsel %vm111, %v306, 0
    %347 = vmatpush.msra.mxu0 0.0
    %348 = vmatpush.msra.mxu0 0.0
    %349 = vmatpush.msra.mxu0 0.0
    %350 = vmatpush.msra.mxu0 0.0
    %351 = vmatpush.msra.mxu0 0.0
    %352 = vmatpush.msra.mxu0 0.0
    %353 = vmatpush.msra.mxu0 0.0
    %354 = vmatpush.msra.mxu0 0.0
    %355 = vmatpush.msra.mxu0 0.0
    %356 = vmatpush.msra.mxu0 0.0
    %357 = vmatpush.msra.mxu0 0.0
    %358 = vmatpush.msra.mxu0 0.0
    %359 = vmatpush.msra.mxu0 0.0
    %360 = vmatpush.msra.mxu0 0.0
    %361 = vmatpush.msra.mxu0 0.0
    %362 = vmatpush.msra.mxu0 %v342
    %363 = vmatmul.f32.gmra.mxu0 %v345
    %v364 = vpop.f32.mrf.mxu0
    %v365 = vadd.f32 0.0, %v364
    %366 = vdwg.mxu0
    %v367 = vmul.f32 %v339, %v313
    %v368 = vmul.f32 %v365, %v314
    %371 = vrot.lane.b32.xlu0 %v367, 8
    %v372 = vpop.permute.xlu0 %371
    %373 = vrot.lane.b32.xlu0 %v368, 8
    %v374 = vpop.permute.xlu0 %373
    %vm377 = vcmask 130112
    %378 = vst.msk [vmem:[#allocation2] sm:$0xff] %vm377, %v372
    %379 = vst.msk [vmem:[#allocation2 + $0x8] sm:$0xff] %vm377, %v374
    %380 = vrot.lane.b32.xlu0 %v103, 112
    %v381 = vpop.permute.xlu0 %380
    %382 = vrot.lane.b32.xlu0 %v103, 80
    %v383 = vpop.permute.xlu0 %382
    %v384 = vsel %vm111, %v381, 0
    %v386 = vsel %vm111, %v383, 0
    %388 = vmatpush.xpose.msra.mxu0 0.0
    %389 = vmatpush.xpose.msra.mxu0 0.0
    %390 = vmatpush.xpose.msra.mxu0 0.0
    %391 = vmatpush.xpose.msra.mxu0 0.0
    %392 = vmatpush.xpose.msra.mxu0 0.0
    %393 = vmatpush.xpose.msra.mxu0 0.0
    %394 = vmatpush.xpose.msra.mxu0 0.0
    %395 = vmatpush.xpose.msra.mxu0 0.0
    %396 = vmatpush.xpose.msra.mxu0 0.0
    %397 = vmatpush.xpose.msra.mxu0 0.0
    %398 = vmatpush.xpose.msra.mxu0 0.0
    %399 = vmatpush.xpose.msra.mxu0 0.0
    %400 = vmatpush.xpose.msra.mxu0 0.0
    %401 = vmatpush.xpose.msra.mxu0 0.0
    %402 = vmatpush.xpose.msra.mxu0 0.0
    %403 = vmatpush.xpose.msra.mxu0 %v386
    %404 = vmatmul.f32.gmra.mxu0 %v384
    %v405 = vpop.f32.mrf.mxu0
    %v406 = vadd.f32 0.0, %v405
    %407 = vdwg.mxu0
    %408 = vrot.lane.b32.xlu0 %v106, 112
    %v409 = vpop.permute.xlu0 %408
    %410 = vrot.lane.b32.xlu0 %v106, 80
    %v411 = vpop.permute.xlu0 %410
    %v412 = vsel %vm111, %v409, 0
    %v414 = vsel %vm111, %v411, 0
    %416 = vmatpush.xpose.msra.mxu0 0.0
    %417 = vmatpush.xpose.msra.mxu0 0.0
    %418 = vmatpush.xpose.msra.mxu0 0.0
    %419 = vmatpush.xpose.msra.mxu0 0.0
    %420 = vmatpush.xpose.msra.mxu0 0.0
    %421 = vmatpush.xpose.msra.mxu0 0.0
    %422 = vmatpush.xpose.msra.mxu0 0.0
    %423 = vmatpush.xpose.msra.mxu0 0.0
    %424 = vmatpush.xpose.msra.mxu0 0.0
    %425 = vmatpush.xpose.msra.mxu0 0.0
    %426 = vmatpush.xpose.msra.mxu0 0.0
    %427 = vmatpush.xpose.msra.mxu0 0.0
    %428 = vmatpush.xpose.msra.mxu0 0.0
    %429 = vmatpush.xpose.msra.mxu0 0.0
    %430 = vmatpush.xpose.msra.mxu0 0.0
    %431 = vmatpush.xpose.msra.mxu0 %v414
    %432 = vmatmul.f32.gmra.mxu0 %v412
    %v433 = vpop.f32.mrf.mxu0
    %v434 = vadd.f32 0.0, %v433
    %435 = vdwg.mxu0
    %v436 = vsel %vm111, %v406, -inf
    %437 = vmax.xlane.f32.xlu0 %v436
    %v438 = vpop.xlane.xlu0 %437
    %v439 = vsel %vm111, %v434, -inf
    %440 = vmax.xlane.f32.xlu0 %v439
    %v441 = vpop.xlane.xlu0 %440
    %v442 = vsub.f32 %v406, %v438
    %v443 = vsub.f32 %v434, %v441
    %v444 = vmul.f32 %v442, 1.442695
    %v445 = vpow.pop %v444
    %v446 = vmul.f32 %v443, 1.442695
    %v447 = vpow.pop %v446
    %v448 = vsel %vm111, %v445, 0.0
    %449 = vadd.xlane.f32.xlu0 %v448
    %v450 = vpop.xlane.xlu0 %449
    %v451 = vsel %vm111, %v447, 0.0
    %452 = vadd.xlane.f32.xlu0 %v451
    %v453 = vpop.xlane.xlu0 %452
    %v454 = vrcp.pop %v450
    %v455 = vrcp.pop %v453
    %456 = vrot.lane.b32.xlu0 %v103, 48
    %v457 = vpop.permute.xlu0 %456
    %v460 = vsel %vm111, %v445, 0
    %462 = vmatpush.msra.mxu0 0.0
    %463 = vmatpush.msra.mxu0 0.0
    %464 = vmatpush.msra.mxu0 0.0
    %465 = vmatpush.msra.mxu0 0.0
    %466 = vmatpush.msra.mxu0 0.0
    %467 = vmatpush.msra.mxu0 0.0
    %468 = vmatpush.msra.mxu0 0.0
    %469 = vmatpush.msra.mxu0 0.0
    %470 = vmatpush.msra.mxu0 0.0
    %471 = vmatpush.msra.mxu0 0.0
    %472 = vmatpush.msra.mxu0 0.0
    %473 = vmatpush.msra.mxu0 0.0
    %474 = vmatpush.msra.mxu0 0.0
    %475 = vmatpush.msra.mxu0 0.0
    %476 = vmatpush.msra.mxu0 0.0
    %477 = vmatpush.msra.mxu0 %v457
    %478 = vmatmul.f32.gmra.mxu0 %v460
    %v479 = vpop.f32.mrf.mxu0
    %v480 = vadd.f32 0.0, %v479
    %481 = vdwg.mxu0
    %482 = vrot.lane.b32.xlu0 %v106, 48
    %v483 = vpop.permute.xlu0 %482
    %v486 = vsel %vm111, %v447, 0
    %488 = vmatpush.msra.mxu0 0.0
    %489 = vmatpush.msra.mxu0 0.0
    %490 = vmatpush.msra.mxu0 0.0
    %491 = vmatpush.msra.mxu0 0.0
    %492 = vmatpush.msra.mxu0 0.0
    %493 = vmatpush.msra.mxu0 0.0
    %494 = vmatpush.msra.mxu0 0.0
    %495 = vmatpush.msra.mxu0 0.0
    %496 = vmatpush.msra.mxu0 0.0
    %497 = vmatpush.msra.mxu0 0.0
    %498 = vmatpush.msra.mxu0 0.0
    %499 = vmatpush.msra.mxu0 0.0
    %500 = vmatpush.msra.mxu0 0.0
    %501 = vmatpush.msra.mxu0 0.0
    %502 = vmatpush.msra.mxu0 0.0
    %503 = vmatpush.msra.mxu0 %v483
    %504 = vmatmul.f32.gmra.mxu0 %v486
    %v505 = vpop.f32.mrf.mxu0
    %v506 = vadd.f32 0.0, %v505
    %507 = vdwg.mxu0
    %v508 = vmul.f32 %v480, %v454
    %v509 = vmul.f32 %v506, %v455
    %512 = vrot.lane.b32.xlu0 %v508, 16
    %v513 = vpop.permute.xlu0 %512
    %514 = vrot.lane.b32.xlu0 %v509, 16
    %v515 = vpop.permute.xlu0 %514
    %vm518 = vcmask 195712
    %519 = vst.msk [vmem:[#allocation2] sm:$0xff] %vm518, %v513
    %520 = vst.msk [vmem:[#allocation2 + $0x8] sm:$0xff] %vm518, %v515
    %521 = vrot.lane.b32.xlu0 %v103, 104
    %v522 = vpop.permute.xlu0 %521
    %523 = vrot.lane.b32.xlu0 %v103, 72
    %v524 = vpop.permute.xlu0 %523
    %v525 = vsel %vm111, %v522, 0
    %v527 = vsel %vm111, %v524, 0
    %529 = vmatpush.xpose.msra.mxu0 0.0
    %530 = vmatpush.xpose.msra.mxu0 0.0
    %531 = vmatpush.xpose.msra.mxu0 0.0
    %532 = vmatpush.xpose.msra.mxu0 0.0
    %533 = vmatpush.xpose.msra.mxu0 0.0
    %534 = vmatpush.xpose.msra.mxu0 0.0
    %535 = vmatpush.xpose.msra.mxu0 0.0
    %536 = vmatpush.xpose.msra.mxu0 0.0
    %537 = vmatpush.xpose.msra.mxu0 0.0
    %538 = vmatpush.xpose.msra.mxu0 0.0
    %539 = vmatpush.xpose.msra.mxu0 0.0
    %540 = vmatpush.xpose.msra.mxu0 0.0
    %541 = vmatpush.xpose.msra.mxu0 0.0
    %542 = vmatpush.xpose.msra.mxu0 0.0
    %543 = vmatpush.xpose.msra.mxu0 0.0
    %544 = vmatpush.xpose.msra.mxu0 %v527
    %545 = vmatmul.f32.gmra.mxu0 %v525
    %v546 = vpop.f32.mrf.mxu0
    %v547 = vadd.f32 0.0, %v546
    %548 = vdwg.mxu0
    %549 = vrot.lane.b32.xlu0 %v106, 104
    %v550 = vpop.permute.xlu0 %549
    %551 = vrot.lane.b32.xlu0 %v106, 72
    %v552 = vpop.permute.xlu0 %551
    %v553 = vsel %vm111, %v550, 0
    %v555 = vsel %vm111, %v552, 0
    %557 = vmatpush.xpose.msra.mxu0 0.0
    %558 = vmatpush.xpose.msra.mxu0 0.0
    %559 = vmatpush.xpose.msra.mxu0 0.0
    %560 = vmatpush.xpose.msra.mxu0 0.0
    %561 = vmatpush.xpose.msra.mxu0 0.0
    %562 = vmatpush.xpose.msra.mxu0 0.0
    %563 = vmatpush.xpose.msra.mxu0 0.0
    %564 = vmatpush.xpose.msra.mxu0 0.0
    %565 = vmatpush.xpose.msra.mxu0 0.0
    %566 = vmatpush.xpose.msra.mxu0 0.0
    %567 = vmatpush.xpose.msra.mxu0 0.0
    %568 = vmatpush.xpose.msra.mxu0 0.0
    %569 = vmatpush.xpose.msra.mxu0 0.0
    %570 = vmatpush.xpose.msra.mxu0 0.0
    %571 = vmatpush.xpose.msra.mxu0 0.0
    %572 = vmatpush.xpose.msra.mxu0 %v555
    %573 = vmatmul.f32.gmra.mxu0 %v553
    %v574 = vpop.f32.mrf.mxu0
    %v575 = vadd.f32 0.0, %v574
    %576 = vdwg.mxu0
    %v577 = vsel %vm111, %v547, -inf
    %578 = vmax.xlane.f32.xlu0 %v577
    %v579 = vpop.xlane.xlu0 %578
    %v580 = vsel %vm111, %v575, -inf
    %581 = vmax.xlane.f32.xlu0 %v580
    %v582 = vpop.xlane.xlu0 %581
    %v583 = vsub.f32 %v547, %v579
    %v584 = vsub.f32 %v575, %v582
    %v585 = vmul.f32 %v583, 1.442695
    %v586 = vpow.pop %v585
    %v587 = vmul.f32 %v584, 1.442695
    %v588 = vpow.pop %v587
    %v589 = vsel %vm111, %v586, 0.0
    %590 = vadd.xlane.f32.xlu0 %v589
    %v591 = vpop.xlane.xlu0 %590
    %v592 = vsel %vm111, %v588, 0.0
    %593 = vadd.xlane.f32.xlu0 %v592
    %v594 = vpop.xlane.xlu0 %593
    %v595 = vrcp.pop %v591
    %v596 = vrcp.pop %v594
    %597 = vrot.lane.b32.xlu0 %v103, 40
    %v598 = vpop.permute.xlu0 %597
    %v601 = vsel %vm111, %v586, 0
    %603 = vmatpush.msra.mxu0 0.0
    %604 = vmatpush.msra.mxu0 0.0
    %605 = vmatpush.msra.mxu0 0.0
    %606 = vmatpush.msra.mxu0 0.0
    %607 = vmatpush.msra.mxu0 0.0
    %608 = vmatpush.msra.mxu0 0.0
    %609 = vmatpush.msra.mxu0 0.0
    %610 = vmatpush.msra.mxu0 0.0
    %611 = vmatpush.msra.mxu0 0.0
    %612 = vmatpush.msra.mxu0 0.0
    %613 = vmatpush.msra.mxu0 0.0
    %614 = vmatpush.msra.mxu0 0.0
    %615 = vmatpush.msra.mxu0 0.0
    %616 = vmatpush.msra.mxu0 0.0
    %617 = vmatpush.msra.mxu0 0.0
    %618 = vmatpush.msra.mxu0 %v598
    %619 = vmatmul.f32.gmra.mxu0 %v601
    %v620 = vpop.f32.mrf.mxu0
    %v621 = vadd.f32 0.0, %v620
    %622 = vdwg.mxu0
    %623 = vrot.lane.b32.xlu0 %v106, 40
    %v624 = vpop.permute.xlu0 %623
    %v627 = vsel %vm111, %v588, 0
    %629 = vmatpush.msra.mxu0 0.0
    %630 = vmatpush.msra.mxu0 0.0
    %631 = vmatpush.msra.mxu0 0.0
    %632 = vmatpush.msra.mxu0 0.0
    %633 = vmatpush.msra.mxu0 0.0
    %634 = vmatpush.msra.mxu0 0.0
    %635 = vmatpush.msra.mxu0 0.0
    %636 = vmatpush.msra.mxu0 0.0
    %637 = vmatpush.msra.mxu0 0.0
    %638 = vmatpush.msra.mxu0 0.0
    %639 = vmatpush.msra.mxu0 0.0
    %640 = vmatpush.msra.mxu0 0.0
    %641 = vmatpush.msra.mxu0 0.0
    %642 = vmatpush.msra.mxu0 0.0
    %643 = vmatpush.msra.mxu0 0.0
    %644 = vmatpush.msra.mxu0 %v624
    %645 = vmatmul.f32.gmra.mxu0 %v627
    %v646 = vpop.f32.mrf.mxu0
    %v647 = vadd.f32 0.0, %v646
    %648 = vdwg.mxu0
    %v649 = vmul.f32 %v621, %v595
    %v650 = vmul.f32 %v647, %v596
    %653 = vrot.lane.b32.xlu0 %v649, 24
    %v654 = vpop.permute.xlu0 %653
    %655 = vrot.lane.b32.xlu0 %v650, 24
    %v656 = vpop.permute.xlu0 %655
    %vm659 = vcmask 261312
    %660 = vst.msk [vmem:[#allocation2] sm:$0xff] %vm659, %v654
    %661 = vst.msk [vmem:[#allocation2 + $0x8] sm:$0xff] %vm659, %v656
    %v662 = vld [vmem:[#allocation2] sm:$0xff]
    %v663 = vld [vmem:[#allocation2 + $0x8] sm:$0xff]
    %v664 = vld [vmem:[#allocation8] sm:$0xff]
    %v665 = vld [vmem:[#allocation8 + $0x8] sm:$0xff]
    %v666 = vld [vmem:[#allocation8 + $0x10] sm:$0xff]
    %v667 = vld [vmem:[#allocation8 + $0x18] sm:$0xff]
    %v668 = vld [vmem:[%s4] sm:$0x1]
    %v670 = vperm.slane %v668, 0
    %v673 = vsel %vm78, %v662, 0
    %v676 = vsel %vm78, %v663, 0
    %678 = vmatpush.msra.mxu0 0.0
    %679 = vmatpush.msra.mxu0 0.0
    %680 = vmatpush.msra.mxu0 0.0
    %681 = vmatpush.msra.mxu0 0.0
    %682 = vmatpush.msra.mxu0 0.0
    %683 = vmatpush.msra.mxu0 0.0
    %684 = vmatpush.msra.mxu0 0.0
    %685 = vmatpush.msra.mxu0 0.0
    %686 = vmatpush.msra.mxu0 0.0
    %687 = vmatpush.msra.mxu0 0.0
    %688 = vmatpush.msra.mxu0 0.0
    %689 = vmatpush.msra.mxu0 0.0
    %690 = vmatpush.msra.mxu0 %v667
    %691 = vmatpush.msra.mxu0 %v666
    %692 = vmatpush.msra.mxu0 %v665
    %693 = vmatpush.msra.mxu0 %v664
    %694 = vmatmul.f32.gmra.mxu0 %v673
    %v695 = vpop.f32.mrf.mxu0
    %v696 = vadd.f32 %v670, %v695
    %697 = vmatmul.f32.gmra.mxu0 %v676
    %v698 = vpop.f32.mrf.mxu0
    %v699 = vadd.f32 %v670, %v698
    %700 = vdwg.mxu0
    %701 = vst [vmem:[#allocation9] sm:$0xff] %v696
    %702 = vst [vmem:[#allocation9 + $0x8] sm:$0xff] %v699
    // Predicated region
    $region34: #{tpu_custom_call.1} parent=1 // pred_check
      _
    $region35: #{tpu_custom_call.1} parent=1 // pred_check_branch
      %704 = sbr.rel (0) target = $region37
    $region36: #{tpu_custom_call.1} parent=1 // pred_region
      %706 = vsyncadd [#allocation5], 0
      %s707 = sshll.u32 [#allocation9], 4
      %s708 = int_to_ptr.vmem [resolvable:$true] %s707
      %s709 = sshll.u32 %s5, 4
      %s710 = int_to_ptr.hbm [resolvable:$true] %s709
      %715 = dma.vmem_to_hbm [thread:$0]  %s708, 256, %s710, [#allocation5], 128, 128, 8
    $region37: #{tpu_custom_call.1} parent=1 // pred_fallthru
      _
    // Predicated region
    $region38: #{tpu_custom_call.1} parent=1 // pred_check
      _
    $region39: #{tpu_custom_call.1} parent=1 // pred_check_branch
      %717 = sbr.rel (0) target = $region41
    $region40: #{tpu_custom_call.1} parent=1 // pred_region
      %719 = dma.done [#allocation5], 256
    $region41: #{tpu_custom_call.1} parent=1 // pred_fallthru
      _
    %720 = vsyncpa [#allocation4], 1
    %721 = vsyncpa [#allocation7], 1
    %722 = vsyncpa [#allocation5], 1

</llo_original>
